<compile_context>
chip_gen: v7x
topology: tpu7x:2x2x1
jax: 0.10.0
libtpu: 0.0.40
codegen_flags: <defaults>
</compile_context>

<pallas_src>
import functools

import jax
import jax.numpy as jnp
from jax.experimental import pallas as pl
from jax.experimental.pallas import tpu as pltpu


def _round_up(x, m):
    return ((x + m - 1) // m) * m


def _device_kind():
    try:
        return jax.devices()[0].device_kind.lower()
    except Exception:
        return ""


def _is_v7():
    return "v7" in _device_kind()


def _select_tiles():
    """(tm, ti) defaults per TPU generation (see roofline notes above)."""
    kind = _device_kind()
    if "v7" in kind:
        return 384, 512
    if "v6" in kind or "trillium" in kind:
        return 512, 1024
    if "v5e" in kind or "v5 lite" in kind or "v5lite" in kind:
        return 256, 1024
    return 256, 512


def prepare_mlp_weights(w_gate, w_up, w_down, *, ti, dtype=None):
    """Pre-transpose / pre-block weights ONCE at load time.

    w_gate, w_up: (I, H) and w_down: (H, I) in PyTorch nn.Linear layout
    (out_features, in_features).

    Returns:
      wgu_blocked: (nk, H, 2*ti)  -- per-block contiguous [gate | up] slabs
      wd_blocked : (nk, ti, H)    -- per-block contiguous down slabs
    with I zero-padded to nk*ti (padded columns/rows contribute exactly 0).
    """
    I, H = w_gate.shape
    if dtype is None:
        dtype = w_gate.dtype
    ti = int(min(ti, _round_up(I, 128)))
    i_pad = _round_up(I, ti)
    nk = i_pad // ti

    def block_in_out(w):  # (I, H) -> (nk, H, ti): column blocks of w.T
        w_t = jnp.asarray(w, dtype).T                       # (H, I)
        if i_pad != I:
            w_t = jnp.pad(w_t, ((0, 0), (0, i_pad - I)))
        return w_t.reshape(H, nk, ti).transpose(1, 0, 2)    # (nk, H, ti)

    wg_b = block_in_out(w_gate)
    wu_b = block_in_out(w_up)
    wgu_blocked = jnp.concatenate([wg_b, wu_b], axis=-1)    # (nk, H, 2*ti)

    wd_t = jnp.asarray(w_down, dtype).T                     # (I, H)
    if i_pad != I:
        wd_t = jnp.pad(wd_t, ((0, i_pad - I), (0, 0)))
    wd_blocked = wd_t.reshape(nk, ti, H)                    # (nk, ti, H)
    return wgu_blocked, wd_blocked


def _mlp_kernel(x_ref, wgu_ref, wd_ref, o_ref, acc_ref):
    # x_ref  : (tm, H)      resident token-row tile
    # wgu_ref: (H, 2*ti)    fused [gate | up] weight block k
    # wd_ref : (ti, H)      down weight block k
    # o_ref  : (tm, H)      output tile (same block across the k axis)
    # acc_ref: (tm, H) f32  accumulator scratch
    k = pl.program_id(1)

    @pl.when(k == 0)
    def _():
        acc_ref[...] = jnp.zeros_like(acc_ref)

    x = x_ref[...]
    gu = jnp.dot(x, wgu_ref[...], preferred_element_type=jnp.float32)  # (tm, 2*ti)
    ti = gu.shape[1] // 2
    g = gu[:, :ti]
    u = gu[:, ti:]
    h = (g * jax.nn.sigmoid(g)) * u  # SiLU(g) * u in f32
    acc_ref[...] += jnp.dot(
        h.astype(x.dtype), wd_ref[...], preferred_element_type=jnp.float32
    )

    @pl.when(k == pl.num_programs(1) - 1)
    def _():
        o_ref[...] = acc_ref[...].astype(o_ref.dtype)


@functools.partial(jax.jit, static_argnames=("tm",))
def mlp_forward(x, wgu_blocked, wd_blocked, *, tm=256):
    """SwiGLU MLP forward.

    x:           (B, S, H) activations (bf16 in production).
    wgu_blocked: (nk, H, 2*ti) fused gate|up weights from prepare_mlp_weights.
    wd_blocked:  (nk, ti, H)   down weights from prepare_mlp_weights.
    """
    B, S, H = x.shape
    nk, _, two_ti = wgu_blocked.shape
    ti = two_ti // 2
    i_pad = nk * ti
    M = B * S
    w_dtype = wgu_blocked.dtype

    x2d = x.reshape(M, H)
    if x2d.dtype != w_dtype:
        x2d = x2d.astype(w_dtype)  # keep MXU inputs in the (bf16) weight dtype

    # --- token-tile (M) sizing: MXU-friendly tiles; pad the ragged tail ---
    tm_eff = min(tm, _round_up(M, 16))  # 16 keeps bf16 sublane packing aligned
    m_pad = _round_up(M, tm_eff)
    # v7x has 2 TensorCores: make sure the "parallel" M axis has >= 2 tiles.
    if _is_v7() and (m_pad // tm_eff) < 2 and M > 16:
        tm_eff = _round_up((M + 1) // 2, 16)
        m_pad = 2 * tm_eff
    if m_pad != M:
        x2d = jnp.pad(x2d, ((0, m_pad - M), (0, 0)))

    grid = (m_pad // tm_eff, nk)

    # --- VMEM budget from the actual block footprint (+ headroom), clamped ---
    w_item = jnp.dtype(w_dtype).itemsize
    o_item = jnp.dtype(x.dtype).itemsize
    blk_bytes = (
        tm_eff * H * w_item          # x block
        + H * two_ti * w_item        # fused gate|up block
        + ti * H * w_item            # down block
        + tm_eff * H * o_item        # output block
    )
    acc_bytes = tm_eff * H * 4
    vmem_limit = 2 * blk_bytes + acc_bytes + 16 * 1024 * 1024
    try:
        phys_vmem = pltpu.get_tpu_info().vmem_capacity_bytes
    except Exception:
        phys_vmem = 128 * 1024 * 1024
    vmem_limit = int(min(vmem_limit, phys_vmem))

    # Advisory cost hint for the XLA scheduler.
    flops = 6 * m_pad * H * i_pad  # three matmuls, 2*M*H*I each
    bytes_accessed = (
        x2d.size * w_item
        + (wgu_blocked.size + wd_blocked.size) * w_item * grid[0]
        + m_pad * H * o_item
    )

    out = pl.pallas_call(
        _mlp_kernel,
        out_shape=jax.ShapeDtypeStruct((m_pad, H), x.dtype),
        grid_spec=pltpu.PrefetchScalarGridSpec(
            num_scalar_prefetch=0,
            grid=grid,
            in_specs=[
                pl.BlockSpec((tm_eff, H), lambda i, k: (i, 0)),        # x rows
                pl.BlockSpec((None, H, two_ti), lambda i, k: (k, 0, 0)),  # gate|up
                pl.BlockSpec((None, ti, H), lambda i, k: (k, 0, 0)),   # down
            ],
            out_specs=pl.BlockSpec((tm_eff, H), lambda i, k: (i, 0)),
            scratch_shapes=[pltpu.VMEM((tm_eff, H), jnp.float32)],
        ),
        compiler_params=pltpu.CompilerParams(
            dimension_semantics=("parallel", "arbitrary"),
            vmem_limit_bytes=vmem_limit,
        ),
        cost_estimate=pl.CostEstimate(
            flops=flops, transcendentals=m_pad * i_pad, bytes_accessed=bytes_accessed
        ),
    )(x2d, wgu_blocked, wd_blocked)

    return out[:M].reshape(B, S, H)


def mlp_reference(x, w_gate, w_up, w_down):
    # Weights in PyTorch nn.Linear layout: (out_features, in_features).
    g = jnp.einsum("bsh,ih->bsi", x, w_gate)
    u = jnp.einsum("bsh,ih->bsi", x, w_up)
    h = (g * jax.nn.sigmoid(g)) * u
    return jnp.einsum("bsi,hi->bsh", h, w_down)


if __name__ == "__main__":
    # Small shapes consistent with the module's forward.
    batch, seq = 2, 8
    hidden_size = 128
    intermediate_size = 256

    key = jax.random.PRNGKey(0)
    kx, kg, ku, kd = jax.random.split(key, 4)

    x = jax.random.normal(kx, (batch, seq, hidden_size), dtype=jnp.float32)
    # PyTorch nn.Linear weight layout: (out_features, in_features).
    w_gate = jax.random.normal(kg, (intermediate_size, hidden_size), jnp.float32) * 0.02
    w_up = jax.random.normal(ku, (intermediate_size, hidden_size), jnp.float32) * 0.02
    w_down = jax.random.normal(kd, (hidden_size, intermediate_size), jnp.float32) * 0.02

    tm, ti = _select_tiles()

    # --- f32 correctness check at small shapes ---
    wgu_b, wd_b = prepare_mlp_weights(w_gate, w_up, w_down, ti=ti, dtype=jnp.float32)
    out = jax.block_until_ready(mlp_forward(x, wgu_b, wd_b, tm=tm))
    ref = mlp_reference(x, w_gate, w_up, w_down)
    assert out.shape == (batch, seq, hidden_size)
    assert jnp.allclose(out, ref, atol=1e-4, rtol=1e-4), "mismatch vs reference (f32)"

    # --- bf16 production path: weights + activations cast once at load time ---
    wgu_bf, wd_bf = prepare_mlp_weights(w_gate, w_up, w_down, ti=ti, dtype=jnp.bfloat16)
    out_bf = jax.block_until_ready(
        mlp_forward(x.astype(jnp.bfloat16), wgu_bf, wd_bf, tm=tm)
    )
    assert out_bf.shape == (batch, seq, hidden_size)
    assert jnp.allclose(
        out_bf.astype(jnp.float32), ref, atol=3e-2, rtol=3e-2
    ), "mismatch vs reference (bf16)"

    print("KERNEL_OK")
</pallas_src>

<mosaic_0001>
module attributes {stable_mosaic.version = 11 : i64} {
  func.func @_mlp_kernel(%arg0: i32, %arg1: i32, %arg2: memref<16x128xf32, #tpu.memory_space<vmem>>, %arg3: memref<1x128x512xf32, #tpu.memory_space<vmem>>, %arg4: memref<1x256x128xf32, #tpu.memory_space<vmem>>, %arg5: memref<16x128xf32, #tpu.memory_space<vmem>>, %arg6: memref<16x128xf32, #tpu.memory_space<vmem>>) attributes {dimension_semantics = [#tpu.dimension_semantics<parallel>, #tpu.dimension_semantics<arbitrary>], iteration_bounds = array<i64: 1, 1>, scalar_prefetch = 0 : i64, scratch_operands = 1 : i64, tpu.core_type = #tpu.core_type<tc>, window_params = [{transform_indices = @transform_0, window_bounds = array<i64: 16, 128>}, {transform_indices = @transform_1, window_bounds = array<i64: 1, 128, 512>}, {transform_indices = @transform_2, window_bounds = array<i64: 1, 256, 128>}, {transform_indices = @transform_3, window_bounds = array<i64: 16, 128>}]} {
    %c0_i32 = arith.constant 0 : i32
    %0 = arith.cmpi eq, %arg1, %c0_i32 : i32
    %1 = arith.extui %0 : i1 to i32
    %c0_i32_0 = arith.constant 0 : i32
    %2 = arith.cmpi ne, %1, %c0_i32_0 : i32
    scf.if %2 {
      %cst_16 = arith.constant 0.000000e+00 : f32
      %25 = vector.broadcast %cst_16 : f32 to vector<16x128xf32>
      %c0_17 = arith.constant 0 : index
      %c0_18 = arith.constant 0 : index
      %26 = vector.load %arg6[%c0_17, %c0_18] : memref<16x128xf32, #tpu.memory_space<vmem>>, vector<16x128xf32>
      tpu.vector_store %arg6[%c0_17, %c0_18], %25 {strides = array<i32>} : memref<16x128xf32, #tpu.memory_space<vmem>>, vector<16x128xf32>,
    } else {
    }
    %c0 = arith.constant 0 : index
    %c0_1 = arith.constant 0 : index
    %3 = vector.load %arg2[%c0, %c0_1] : memref<16x128xf32, #tpu.memory_space<vmem>>, vector<16x128xf32>
    %c0_2 = arith.constant 0 : index
    %c0_3 = arith.constant 0 : index
    %c0_4 = arith.constant 0 : index
    %4 = vector.load %arg3[%c0_2, %c0_3, %c0_4] : memref<1x128x512xf32, #tpu.memory_space<vmem>>, vector<1x128x512xf32>
    %5 = vector.shape_cast %4 : vector<1x128x512xf32> to vector<128x512xf32>
    %cst = arith.constant dense<0.000000e+00> : vector<16x512xf32>
    %6 = tpu.matmul %3, %5, %cst {dimension_numbers = #tpu.dot_dimension_numbers<[1], [0], [0], [1], [0, 0, 1, 1], [], []>} : vector<16x128xf32>, vector<128x512xf32>, vector<16x512xf32> -> vector<16x512xf32>
    %7 = vector.extract_strided_slice %6 {offsets = [0, 0], sizes = [16, 256], strides = [1, 1]} : vector<16x512xf32> to vector<16x256xf32>
    %8 = vector.extract_strided_slice %6 {offsets = [0, 256], sizes = [16, 256], strides = [1, 1]} : vector<16x512xf32> to vector<16x256xf32>
    %9 = arith.negf %7 : vector<16x256xf32>
    %10 = math.exp %9 : vector<16x256xf32>
    %cst_5 = arith.constant 1.000000e+00 : f32
    %11 = vector.broadcast %cst_5 : f32 to vector<16x256xf32>
    %12 = arith.addf %11, %10 : vector<16x256xf32>
    %13 = arith.divf %11, %12 : vector<16x256xf32>
    %14 = arith.mulf %7, %13 : vector<16x256xf32>
    %15 = arith.mulf %14, %8 : vector<16x256xf32>
    %c0_6 = arith.constant 0 : index
    %c0_7 = arith.constant 0 : index
    %16 = vector.load %arg6[%c0_6, %c0_7] : memref<16x128xf32, #tpu.memory_space<vmem>>, vector<16x128xf32>
    %c0_8 = arith.constant 0 : index
    %c0_9 = arith.constant 0 : index
    %c0_10 = arith.constant 0 : index
    %17 = vector.load %arg4[%c0_8, %c0_9, %c0_10] : memref<1x256x128xf32, #tpu.memory_space<vmem>>, vector<1x256x128xf32>
    %18 = vector.shape_cast %17 : vector<1x256x128xf32> to vector<256x128xf32>
    %cst_11 = arith.constant dense<0.000000e+00> : vector<16x128xf32>
    %19 = tpu.matmul %15, %18, %cst_11 {dimension_numbers = #tpu.dot_dimension_numbers<[1], [0], [0], [1], [0, 0, 1, 1], [], []>} : vector<16x256xf32>, vector<256x128xf32>, vector<16x128xf32> -> vector<16x128xf32>
    %20 = arith.addf %16, %19 : vector<16x128xf32>
    %c0_12 = arith.constant 0 : index
    %c0_13 = arith.constant 0 : index
    %21 = vector.load %arg6[%c0_12, %c0_13] : memref<16x128xf32, #tpu.memory_space<vmem>>, vector<16x128xf32>
    tpu.vector_store %arg6[%c0_12, %c0_13], %20 {strides = array<i32>} : memref<16x128xf32, #tpu.memory_space<vmem>>, vector<16x128xf32>,
    %c0_i32_14 = arith.constant 0 : i32
    %22 = arith.cmpi eq, %arg1, %c0_i32_14 : i32
    %23 = arith.extui %22 : i1 to i32
    %c0_i32_15 = arith.constant 0 : i32
    %24 = arith.cmpi ne, %23, %c0_i32_15 : i32
    scf.if %24 {
      %c0_16 = arith.constant 0 : index
      %c0_17 = arith.constant 0 : index
      %25 = vector.load %arg6[%c0_16, %c0_17] : memref<16x128xf32, #tpu.memory_space<vmem>>, vector<16x128xf32>
      %c0_18 = arith.constant 0 : index
      %c0_19 = arith.constant 0 : index
      %26 = vector.load %arg5[%c0_18, %c0_19] : memref<16x128xf32, #tpu.memory_space<vmem>>, vector<16x128xf32>
      tpu.vector_store %arg5[%c0_18, %c0_19], %25 {strides = array<i32>} : memref<16x128xf32, #tpu.memory_space<vmem>>, vector<16x128xf32>,
    } else {
    }
    return
  }
  func.func @transform_0(%arg0: i32, %arg1: i32) -> (i32, i32) {
    %c0_i32 = arith.constant 0 : i32
    %c0_i32_0 = arith.constant 0 : i32
    return %arg0, %c0_i32 : i32, i32
  }
  func.func @transform_1(%arg0: i32, %arg1: i32) -> (i32, i32, i32) {
    %c0_i32 = arith.constant 0 : i32
    %c0_i32_0 = arith.constant 0 : i32
    %c0_i32_1 = arith.constant 0 : i32
    return %arg1, %c0_i32, %c0_i32_0 : i32, i32, i32
  }
  func.func @transform_2(%arg0: i32, %arg1: i32) -> (i32, i32, i32) {
    %c0_i32 = arith.constant 0 : i32
    %c0_i32_0 = arith.constant 0 : i32
    %c0_i32_1 = arith.constant 0 : i32
    return %arg1, %c0_i32, %c0_i32_0 : i32, i32, i32
  }
  func.func @transform_3(%arg0: i32, %arg1: i32) -> (i32, i32) {
    %c0_i32 = arith.constant 0 : i32
    %c0_i32_0 = arith.constant 0 : i32
    return %arg0, %c0_i32 : i32, i32
  }
}

</mosaic_0001>

<llo_original>
// kernel: mlp_forward.1
$region0: #{mlp_forward.1}
  #allocation0 [shape = 'u32[]', space=smem, size = 0x4, offset = 0x4, fixed_abs, tag = 'smem constant byte address 0x4 - core index']
  #allocation1 [shape = 'u32[144,128]{1,0:T(1,128)}', space=vmem, size = 0x12000, scoped, tag = 'internal scratch']
  #allocation2 [shape = 'f32[16,128]{1,0:T(8,128)}', space=vmem, size = 0x2000, scoped, tag = 'scratch operand']
  %s0 = inlined_call_operand.hbm [shape: f32[16,128], index: 0, kind: input, shape index: {}]
  %s1 = inlined_call_operand.hbm [shape: f32[1,128,512], index: 1, kind: input, shape index: {}]
  %s2 = inlined_call_operand.hbm [shape: f32[1,256,128], index: 2, kind: input, shape index: {}]
  %s3 = inlined_call_operand.hbm [shape: f32[16,128], index: 3, kind: output, shape index: {}]
  %s4 = sld [smem:[#allocation0]]
  $region42: #{mlp_forward.1} parent=0
    _
  %s6 = ssub.s32 1, %s4
  %s7 = scalar_select 0, %s6, %s4
  $region1: #{mlp_forward.1} parent=0
    #allocation3 [shape = 'u8[8192]{0}', space=vmem, size = 0x2000, scoped, tag = 'input window, operand 0, single buffered']
    #allocation4 [shape = 's32[1]{0}', space=sflag, size = 0x4, scoped, tag = 'scoped memory for mlp_forward.1']
    #allocation5 [shape = 's32[1]{0}', space=sflag, size = 0x4, scoped, tag = 'scoped memory for mlp_forward.1']
    #allocation6 [shape = 'u8[262144]{0}', space=vmem, size = 0x40000, scoped, tag = 'input window, operand 1, single buffered']
    #allocation7 [shape = 's32[1]{0}', space=sflag, size = 0x4, scoped, tag = 'scoped memory for mlp_forward.1']
    #allocation8 [shape = 'u8[131072]{0}', space=vmem, size = 0x20000, scoped, tag = 'input window, operand 2, single buffered']
    #allocation9 [shape = 'u8[8192]{0}', space=vmem, size = 0x2000, scoped, tag = 'output window, operand 0, single buffered']
    %8 = vsyncpa [#allocation4], 0
    %9 = vsyncpa [#allocation7], 0
    %10 = vsyncpa [#allocation5], 0
    // Predicated region
    $region2: #{mlp_forward.1} parent=1 // pred_check
      _
    $region3: #{mlp_forward.1} parent=1 // pred_check_branch
      %12 = sbr.rel (0) target = $region5
    $region4: #{mlp_forward.1} parent=1 // pred_region
      %s14 = ssub.s32 256, 256
      %15 = vsyncadd [#allocation4], %s14
      %s16 = sshll.u32 [#allocation3], 4
      %s17 = int_to_ptr.vmem [resolvable:$true] %s16
      %22 = dma.hbm_to_vmem [thread:$0]  %s0, 256, %s17, [#allocation4], 128, 128, 8
    $region5: #{mlp_forward.1} parent=1 // pred_fallthru
      _
    // Predicated region
    $region6: #{mlp_forward.1} parent=1 // pred_check
      _
    $region7: #{mlp_forward.1} parent=1 // pred_check_branch
      %24 = sbr.rel (0) target = $region9
    $region8: #{mlp_forward.1} parent=1 // pred_region
      %s26 = ssub.s32 8192, 8192
      %27 = vsyncadd [#allocation7], %s26
      %s28 = sshll.u32 [#allocation6], 4
      %s29 = int_to_ptr.vmem [resolvable:$true] %s28
      %34 = dma.hbm_to_vmem [thread:$0]  %s1, 8192, %s29, [#allocation7], 512, 512, 32
    $region9: #{mlp_forward.1} parent=1 // pred_fallthru
      _
    // Predicated region
    $region10: #{mlp_forward.1} parent=1 // pred_check
      _
    $region11: #{mlp_forward.1} parent=1 // pred_check_branch
      %36 = sbr.rel (0) target = $region13
    $region12: #{mlp_forward.1} parent=1 // pred_region
      %s38 = ssub.s32 4096, 4096
      %39 = vsyncadd [#allocation7], %s38
      %s40 = sshll.u32 [#allocation8], 4
      %s41 = int_to_ptr.vmem [resolvable:$true] %s40
      %46 = dma.hbm_to_vmem [thread:$0]  %s2, 4096, %s41, [#allocation7], 128, 128, 8
    $region13: #{mlp_forward.1} parent=1 // pred_fallthru
      _
    // Predicated region
    $region14: #{mlp_forward.1} parent=1 // pred_check
      _
    $region15: #{mlp_forward.1} parent=1 // pred_check_branch
      %48 = sbr.rel (0) target = $region17
    $region16: #{mlp_forward.1} parent=1 // pred_region
      %49 = dma.done [#allocation4], 256
    $region17: #{mlp_forward.1} parent=1 // pred_fallthru
      _
    // Predicated region
    $region18: #{mlp_forward.1} parent=1 // pred_check
      _
    $region19: #{mlp_forward.1} parent=1 // pred_check_branch
      %51 = sbr.rel (0) target = $region21
    $region20: #{mlp_forward.1} parent=1 // pred_region
      %52 = dma.done [#allocation7], 8192
    $region21: #{mlp_forward.1} parent=1 // pred_fallthru
      _
    // Predicated region
    $region22: #{mlp_forward.1} parent=1 // pred_check
      _
    $region23: #{mlp_forward.1} parent=1 // pred_check_branch
      %54 = sbr.rel (0) target = $region25
    $region24: #{mlp_forward.1} parent=1 // pred_region
      %55 = dma.done [#allocation7], 4096
    $region25: #{mlp_forward.1} parent=1 // pred_fallthru
      _
    %p56 = scmp.eq.s32.totalorder 0, 0
    // Predicated region
    $region26: #{mlp_forward.1} parent=1 // pred_check
      %p57 = pneg %p56
    $region27: #{mlp_forward.1} parent=1 // pred_check_branch
      %59 = sbr.rel (%p57) target = $region29
    $region28: #{mlp_forward.1} parent=1 // pred_region
      %60 = vst [vmem:[#allocation2] sm:$0xff] 0.0
      %61 = vst [vmem:[#allocation2 + $0x8] sm:$0xff] 0.0
    $region29: #{mlp_forward.1} parent=1 // pred_fallthru
      _
    %v62 = vld [vmem:[#allocation3] sm:$0xff]
    %v63 = vld [vmem:[#allocation3 + $0x8] sm:$0xff]
    %v64 = vld [vmem:[#allocation6] sm:$0xff]
    %v65 = vld [vmem:[#allocation6 + $0x8] sm:$0xff]
    %v66 = vld [vmem:[#allocation6 + $0x10] sm:$0xff]
    %v67 = vld [vmem:[#allocation6 + $0x18] sm:$0xff]
    %v68 = vld [vmem:[#allocation6 + $0x20] sm:$0xff]
    %v69 = vld [vmem:[#allocation6 + $0x28] sm:$0xff]
    %v70 = vld [vmem:[#allocation6 + $0x30] sm:$0xff]
    %v71 = vld [vmem:[#allocation6 + $0x38] sm:$0xff]
    %v72 = vld [vmem:[#allocation6 + $0x40] sm:$0xff]
    %v73 = vld [vmem:[#allocation6 + $0x48] sm:$0xff]
    %v74 = vld [vmem:[#allocation6 + $0x50] sm:$0xff]
    %v75 = vld [vmem:[#allocation6 + $0x58] sm:$0xff]
    %v76 = vld [vmem:[#allocation6 + $0x60] sm:$0xff]
    %v77 = vld [vmem:[#allocation6 + $0x68] sm:$0xff]
    %v78 = vld [vmem:[#allocation6 + $0x70] sm:$0xff]
    %v79 = vld [vmem:[#allocation6 + $0x78] sm:$0xff]
    %v80 = vld [vmem:[#allocation6 + $0x80] sm:$0xff]
    %v81 = vld [vmem:[#allocation6 + $0x88] sm:$0xff]
    %v82 = vld [vmem:[#allocation6 + $0x90] sm:$0xff]
    %v83 = vld [vmem:[#allocation6 + $0x98] sm:$0xff]
    %v84 = vld [vmem:[#allocation6 + $0xa0] sm:$0xff]
    %v85 = vld [vmem:[#allocation6 + $0xa8] sm:$0xff]
    %v86 = vld [vmem:[#allocation6 + $0xb0] sm:$0xff]
    %v87 = vld [vmem:[#allocation6 + $0xb8] sm:$0xff]
    %v88 = vld [vmem:[#allocation6 + $0xc0] sm:$0xff]
    %v89 = vld [vmem:[#allocation6 + $0xc8] sm:$0xff]
    %v90 = vld [vmem:[#allocation6 + $0xd0] sm:$0xff]
    %v91 = vld [vmem:[#allocation6 + $0xd8] sm:$0xff]
    %v92 = vld [vmem:[#allocation6 + $0xe0] sm:$0xff]
    %v93 = vld [vmem:[#allocation6 + $0xe8] sm:$0xff]
    %v94 = vld [vmem:[#allocation6 + $0xf0] sm:$0xff]
    %v95 = vld [vmem:[#allocation6 + $0xf8] sm:$0xff]
    %v96 = vld [vmem:[#allocation6 + $0x100] sm:$0xff]
    %v97 = vld [vmem:[#allocation6 + $0x108] sm:$0xff]
    %v98 = vld [vmem:[#allocation6 + $0x110] sm:$0xff]
    %v99 = vld [vmem:[#allocation6 + $0x118] sm:$0xff]
    %v100 = vld [vmem:[#allocation6 + $0x120] sm:$0xff]
    %v101 = vld [vmem:[#allocation6 + $0x128] sm:$0xff]
    %v102 = vld [vmem:[#allocation6 + $0x130] sm:$0xff]
    %v103 = vld [vmem:[#allocation6 + $0x138] sm:$0xff]
    %v104 = vld [vmem:[#allocation6 + $0x140] sm:$0xff]
    %v105 = vld [vmem:[#allocation6 + $0x148] sm:$0xff]
    %v106 = vld [vmem:[#allocation6 + $0x150] sm:$0xff]
    %v107 = vld [vmem:[#allocation6 + $0x158] sm:$0xff]
    %v108 = vld [vmem:[#allocation6 + $0x160] sm:$0xff]
    %v109 = vld [vmem:[#allocation6 + $0x168] sm:$0xff]
    %v110 = vld [vmem:[#allocation6 + $0x170] sm:$0xff]
    %v111 = vld [vmem:[#allocation6 + $0x178] sm:$0xff]
    %v112 = vld [vmem:[#allocation6 + $0x180] sm:$0xff]
    %v113 = vld [vmem:[#allocation6 + $0x188] sm:$0xff]
    %v114 = vld [vmem:[#allocation6 + $0x190] sm:$0xff]
    %v115 = vld [vmem:[#allocation6 + $0x198] sm:$0xff]
    %v116 = vld [vmem:[#allocation6 + $0x1a0] sm:$0xff]
    %v117 = vld [vmem:[#allocation6 + $0x1a8] sm:$0xff]
    %v118 = vld [vmem:[#allocation6 + $0x1b0] sm:$0xff]
    %v119 = vld [vmem:[#allocation6 + $0x1b8] sm:$0xff]
    %v120 = vld [vmem:[#allocation6 + $0x1c0] sm:$0xff]
    %v121 = vld [vmem:[#allocation6 + $0x1c8] sm:$0xff]
    %v122 = vld [vmem:[#allocation6 + $0x1d0] sm:$0xff]
    %v123 = vld [vmem:[#allocation6 + $0x1d8] sm:$0xff]
    %v124 = vld [vmem:[#allocation6 + $0x1e0] sm:$0xff]
    %v125 = vld [vmem:[#allocation6 + $0x1e8] sm:$0xff]
    %v126 = vld [vmem:[#allocation6 + $0x1f0] sm:$0xff]
    %v127 = vld [vmem:[#allocation6 + $0x1f8] sm:$0xff]
    %128 = vmatprep.subr.mxu0 %v65
    %129 = vmatpush1.msra.mxu0 %v64
    %130 = vmatprep.subr.mxu0 %v69
    %131 = vmatpush1.msra.mxu0 %v68
    %132 = vmatprep.subr.mxu0 %v73
    %133 = vmatpush1.msra.mxu0 %v72
    %134 = vmatprep.subr.mxu0 %v77
    %135 = vmatpush1.msra.mxu0 %v76
    %136 = vmatprep.subr.mxu0 %v81
    %137 = vmatpush1.msra.mxu0 %v80
    %138 = vmatprep.subr.mxu0 %v85
    %139 = vmatpush1.msra.mxu0 %v84
    %140 = vmatprep.subr.mxu0 %v89
    %141 = vmatpush1.msra.mxu0 %v88
    %142 = vmatprep.subr.mxu0 %v93
    %143 = vmatpush1.msra.mxu0 %v92
    %144 = vmatprep.subr.mxu0 %v97
    %145 = vmatpush1.msra.mxu0 %v96
    %146 = vmatprep.subr.mxu0 %v101
    %147 = vmatpush1.msra.mxu0 %v100
    %148 = vmatprep.subr.mxu0 %v105
    %149 = vmatpush1.msra.mxu0 %v104
    %150 = vmatprep.subr.mxu0 %v109
    %151 = vmatpush1.msra.mxu0 %v108
    %152 = vmatprep.subr.mxu0 %v113
    %153 = vmatpush1.msra.mxu0 %v112
    %154 = vmatprep.subr.mxu0 %v117
    %155 = vmatpush1.msra.mxu0 %v116
    %156 = vmatprep.subr.mxu0 %v121
    %157 = vmatpush1.msra.mxu0 %v120
    %158 = vmatprep.subr.mxu0 %v125
    %159 = vmatpush1.msra.mxu0 %v124
    %160 = vmatprep.subr.mxu0 0.0
    %161 = vmatpush1.msra.mxu0 0.0
    %162 = vmatprep.subr.mxu0 0.0
    %163 = vmatpush1.msra.mxu0 0.0
    %164 = vmatprep.subr.mxu0 0.0
    %165 = vmatpush1.msra.mxu0 0.0
    %166 = vmatprep.subr.mxu0 0.0
    %167 = vmatpush1.msra.mxu0 0.0
    %168 = vmatprep.subr.mxu0 0.0
    %169 = vmatpush1.msra.mxu0 0.0
    %170 = vmatprep.subr.mxu0 0.0
    %171 = vmatpush1.msra.mxu0 0.0
    %172 = vmatprep.subr.mxu0 0.0
    %173 = vmatpush1.msra.mxu0 0.0
    %174 = vmatprep.subr.mxu0 0.0
    %175 = vmatpush1.msra.mxu0 0.0
    %176 = vmatprep.subr.mxu0 0.0
    %177 = vmatpush1.msra.mxu0 0.0
    %178 = vmatprep.subr.mxu0 0.0
    %179 = vmatpush1.msra.mxu0 0.0
    %180 = vmatprep.subr.mxu0 0.0
    %181 = vmatpush1.msra.mxu0 0.0
    %182 = vmatprep.subr.mxu0 0.0
    %183 = vmatpush1.msra.mxu0 0.0
    %184 = vmatprep.subr.mxu0 0.0
    %185 = vmatpush1.msra.mxu0 0.0
    %186 = vmatprep.subr.mxu0 0.0
    %187 = vmatpush1.msra.mxu0 0.0
    %188 = vmatprep.subr.mxu0 0.0
    %189 = vmatpush1.msra.mxu0 0.0
    %190 = vmatprep.subr.mxu0 0.0
    %191 = vmatpush1.msra.mxu0 0.0
    %192 = vmatprep.mubr.f32.mxu0 0.0
    %193 = vmatmul.mubr.f32.gmra.mrb[0].mxu0 %v62
    %v194 = vpop.f32.mrb[0].mxu0
    %v195 = vadd.f32 0.0, %v194
    %v196 = vpop.f32.mrb[0].mxu0
    %v197 = vadd.f32 0.0, %v196
    %198 = vmatprep.mubr.f32.mxu0 0.0
    %199 = vmatmul.mubr.f32.gmra.mrb[0].mxu0 %v63
    %v200 = vpop.f32.mrb[0].mxu0
    %v201 = vadd.f32 0.0, %v200
    %v202 = vpop.f32.mrb[0].mxu0
    %v203 = vadd.f32 0.0, %v202
    %204 = vdwg.mxu0
    %205 = vmatprep.subr.mxu0 %v67
    %206 = vmatpush1.msra.mxu0 %v66
    %207 = vmatprep.subr.mxu0 %v71
    %208 = vmatpush1.msra.mxu0 %v70
    %209 = vmatprep.subr.mxu0 %v75
    %210 = vmatpush1.msra.mxu0 %v74
    %211 = vmatprep.subr.mxu0 %v79
    %212 = vmatpush1.msra.mxu0 %v78
    %213 = vmatprep.subr.mxu0 %v83
    %214 = vmatpush1.msra.mxu0 %v82
    %215 = vmatprep.subr.mxu0 %v87
    %216 = vmatpush1.msra.mxu0 %v86
    %217 = vmatprep.subr.mxu0 %v91
    %218 = vmatpush1.msra.mxu0 %v90
    %219 = vmatprep.subr.mxu0 %v95
    %220 = vmatpush1.msra.mxu0 %v94
    %221 = vmatprep.subr.mxu0 %v99
    %222 = vmatpush1.msra.mxu0 %v98
    %223 = vmatprep.subr.mxu0 %v103
    %224 = vmatpush1.msra.mxu0 %v102
    %225 = vmatprep.subr.mxu0 %v107
    %226 = vmatpush1.msra.mxu0 %v106
    %227 = vmatprep.subr.mxu0 %v111
    %228 = vmatpush1.msra.mxu0 %v110
    %229 = vmatprep.subr.mxu0 %v115
    %230 = vmatpush1.msra.mxu0 %v114
    %231 = vmatprep.subr.mxu0 %v119
    %232 = vmatpush1.msra.mxu0 %v118
    %233 = vmatprep.subr.mxu0 %v123
    %234 = vmatpush1.msra.mxu0 %v122
    %235 = vmatprep.subr.mxu0 %v127
    %236 = vmatpush1.msra.mxu0 %v126
    %237 = vmatprep.subr.mxu0 0.0
    %238 = vmatpush1.msra.mxu0 0.0
    %239 = vmatprep.subr.mxu0 0.0
    %240 = vmatpush1.msra.mxu0 0.0
    %241 = vmatprep.subr.mxu0 0.0
    %242 = vmatpush1.msra.mxu0 0.0
    %243 = vmatprep.subr.mxu0 0.0
    %244 = vmatpush1.msra.mxu0 0.0
    %245 = vmatprep.subr.mxu0 0.0
    %246 = vmatpush1.msra.mxu0 0.0
    %247 = vmatprep.subr.mxu0 0.0
    %248 = vmatpush1.msra.mxu0 0.0
    %249 = vmatprep.subr.mxu0 0.0
    %250 = vmatpush1.msra.mxu0 0.0
    %251 = vmatprep.subr.mxu0 0.0
    %252 = vmatpush1.msra.mxu0 0.0
    %253 = vmatprep.subr.mxu0 0.0
    %254 = vmatpush1.msra.mxu0 0.0
    %255 = vmatprep.subr.mxu0 0.0
    %256 = vmatpush1.msra.mxu0 0.0
    %257 = vmatprep.subr.mxu0 0.0
    %258 = vmatpush1.msra.mxu0 0.0
    %259 = vmatprep.subr.mxu0 0.0
    %260 = vmatpush1.msra.mxu0 0.0
    %261 = vmatprep.subr.mxu0 0.0
    %262 = vmatpush1.msra.mxu0 0.0
    %263 = vmatprep.subr.mxu0 0.0
    %264 = vmatpush1.msra.mxu0 0.0
    %265 = vmatprep.subr.mxu0 0.0
    %266 = vmatpush1.msra.mxu0 0.0
    %267 = vmatprep.subr.mxu0 0.0
    %268 = vmatpush1.msra.mxu0 0.0
    %269 = vmatprep.mubr.f32.mxu0 0.0
    %270 = vmatmul.mubr.f32.gmra.mrb[0].mxu0 %v62
    %v271 = vpop.f32.mrb[0].mxu0
    %v272 = vadd.f32 0.0, %v271
    %v273 = vpop.f32.mrb[0].mxu0
    %v274 = vadd.f32 0.0, %v273
    %275 = vmatprep.mubr.f32.mxu0 0.0
    %276 = vmatmul.mubr.f32.gmra.mrb[0].mxu0 %v63
    %v277 = vpop.f32.mrb[0].mxu0
    %v278 = vadd.f32 0.0, %v277
    %v279 = vpop.f32.mrb[0].mxu0
    %v280 = vadd.f32 0.0, %v279
    %281 = vdwg.mxu0
    %v282 = vxor.u32 %v195, 2147483648
    %v283 = vxor.u32 %v197, 2147483648
    %v284 = vxor.u32 %v201, 2147483648
    %v285 = vxor.u32 %v203, 2147483648
    %v286 = vmul.f32 %v282, 1.442695
    %v287 = vpow.pop %v286
    %v288 = vmul.f32 %v283, 1.442695
    %v289 = vpow.pop %v288
    %v290 = vmul.f32 %v284, 1.442695
    %v291 = vpow.pop %v290
    %v292 = vmul.f32 %v285, 1.442695
    %v293 = vpow.pop %v292
    %v294 = vadd.f32 %v287, 1.0
    %v295 = vadd.f32 %v289, 1.0
    %v296 = vadd.f32 %v291, 1.0
    %v297 = vadd.f32 %v293, 1.0
    %v298 = vrcp.pop %v294
    %v299 = vmul.f32 1.0, %v298
    %v300 = vrcp.pop %v295
    %v301 = vmul.f32 1.0, %v300
    %v302 = vrcp.pop %v296
    %v303 = vmul.f32 1.0, %v302
    %v304 = vrcp.pop %v297
    %v305 = vmul.f32 1.0, %v304
    %v306 = vmul.f32 %v195, %v299
    %v307 = vmul.f32 %v197, %v301
    %v308 = vmul.f32 %v201, %v303
    %v309 = vmul.f32 %v203, %v305
    %v310 = vmul.f32 %v306, %v272
    %v311 = vmul.f32 %v307, %v274
    %v312 = vmul.f32 %v308, %v278
    %v313 = vmul.f32 %v309, %v280
    %v314 = vld [vmem:[#allocation2] sm:$0xff]
    %v315 = vld [vmem:[#allocation2 + $0x8] sm:$0xff]
    %v316 = vld [vmem:[#allocation8] sm:$0xff]
    %v317 = vld [vmem:[#allocation8 + $0x8] sm:$0xff]
    %v318 = vld [vmem:[#allocation8 + $0x10] sm:$0xff]
    %v319 = vld [vmem:[#allocation8 + $0x18] sm:$0xff]
    %v320 = vld [vmem:[#allocation8 + $0x20] sm:$0xff]
    %v321 = vld [vmem:[#allocation8 + $0x28] sm:$0xff]
    %v322 = vld [vmem:[#allocation8 + $0x30] sm:$0xff]
    %v323 = vld [vmem:[#allocation8 + $0x38] sm:$0xff]
    %v324 = vld [vmem:[#allocation8 + $0x40] sm:$0xff]
    %v325 = vld [vmem:[#allocation8 + $0x48] sm:$0xff]
    %v326 = vld [vmem:[#allocation8 + $0x50] sm:$0xff]
    %v327 = vld [vmem:[#allocation8 + $0x58] sm:$0xff]
    %v328 = vld [vmem:[#allocation8 + $0x60] sm:$0xff]
    %v329 = vld [vmem:[#allocation8 + $0x68] sm:$0xff]
    %v330 = vld [vmem:[#allocation8 + $0x70] sm:$0xff]
    %v331 = vld [vmem:[#allocation8 + $0x78] sm:$0xff]
    %v332 = vld [vmem:[#allocation8 + $0x80] sm:$0xff]
    %v333 = vld [vmem:[#allocation8 + $0x88] sm:$0xff]
    %v334 = vld [vmem:[#allocation8 + $0x90] sm:$0xff]
    %v335 = vld [vmem:[#allocation8 + $0x98] sm:$0xff]
    %v336 = vld [vmem:[#allocation8 + $0xa0] sm:$0xff]
    %v337 = vld [vmem:[#allocation8 + $0xa8] sm:$0xff]
    %v338 = vld [vmem:[#allocation8 + $0xb0] sm:$0xff]
    %v339 = vld [vmem:[#allocation8 + $0xb8] sm:$0xff]
    %v340 = vld [vmem:[#allocation8 + $0xc0] sm:$0xff]
    %v341 = vld [vmem:[#allocation8 + $0xc8] sm:$0xff]
    %v342 = vld [vmem:[#allocation8 + $0xd0] sm:$0xff]
    %v343 = vld [vmem:[#allocation8 + $0xd8] sm:$0xff]
    %v344 = vld [vmem:[#allocation8 + $0xe0] sm:$0xff]
    %v345 = vld [vmem:[#allocation8 + $0xe8] sm:$0xff]
    %v346 = vld [vmem:[#allocation8 + $0xf0] sm:$0xff]
    %v347 = vld [vmem:[#allocation8 + $0xf8] sm:$0xff]
    %348 = vmatprep.subr.mxu0 0.0
    %349 = vmatpush1.msra.mxu0 %v316
    %350 = vmatprep.subr.mxu0 0.0
    %351 = vmatpush1.msra.mxu0 %v317
    %352 = vmatprep.subr.mxu0 0.0
    %353 = vmatpush1.msra.mxu0 %v318
    %354 = vmatprep.subr.mxu0 0.0
    %355 = vmatpush1.msra.mxu0 %v319
    %356 = vmatprep.subr.mxu0 0.0
    %357 = vmatpush1.msra.mxu0 %v320
    %358 = vmatprep.subr.mxu0 0.0
    %359 = vmatpush1.msra.mxu0 %v321
    %360 = vmatprep.subr.mxu0 0.0
    %361 = vmatpush1.msra.mxu0 %v322
    %362 = vmatprep.subr.mxu0 0.0
    %363 = vmatpush1.msra.mxu0 %v323
    %364 = vmatprep.subr.mxu0 0.0
    %365 = vmatpush1.msra.mxu0 %v324
    %366 = vmatprep.subr.mxu0 0.0
    %367 = vmatpush1.msra.mxu0 %v325
    %368 = vmatprep.subr.mxu0 0.0
    %369 = vmatpush1.msra.mxu0 %v326
    %370 = vmatprep.subr.mxu0 0.0
    %371 = vmatpush1.msra.mxu0 %v327
    %372 = vmatprep.subr.mxu0 0.0
    %373 = vmatpush1.msra.mxu0 %v328
    %374 = vmatprep.subr.mxu0 0.0
    %375 = vmatpush1.msra.mxu0 %v329
    %376 = vmatprep.subr.mxu0 0.0
    %377 = vmatpush1.msra.mxu0 %v330
    %378 = vmatprep.subr.mxu0 0.0
    %379 = vmatpush1.msra.mxu0 %v331
    %380 = vmatprep.subr.mxu0 0.0
    %381 = vmatpush1.msra.mxu0 %v332
    %382 = vmatprep.subr.mxu0 0.0
    %383 = vmatpush1.msra.mxu0 %v333
    %384 = vmatprep.subr.mxu0 0.0
    %385 = vmatpush1.msra.mxu0 %v334
    %386 = vmatprep.subr.mxu0 0.0
    %387 = vmatpush1.msra.mxu0 %v335
    %388 = vmatprep.subr.mxu0 0.0
    %389 = vmatpush1.msra.mxu0 %v336
    %390 = vmatprep.subr.mxu0 0.0
    %391 = vmatpush1.msra.mxu0 %v337
    %392 = vmatprep.subr.mxu0 0.0
    %393 = vmatpush1.msra.mxu0 %v338
    %394 = vmatprep.subr.mxu0 0.0
    %395 = vmatpush1.msra.mxu0 %v339
    %396 = vmatprep.subr.mxu0 0.0
    %397 = vmatpush1.msra.mxu0 %v340
    %398 = vmatprep.subr.mxu0 0.0
    %399 = vmatpush1.msra.mxu0 %v341
    %400 = vmatprep.subr.mxu0 0.0
    %401 = vmatpush1.msra.mxu0 %v342
    %402 = vmatprep.subr.mxu0 0.0
    %403 = vmatpush1.msra.mxu0 %v343
    %404 = vmatprep.subr.mxu0 0.0
    %405 = vmatpush1.msra.mxu0 %v344
    %406 = vmatprep.subr.mxu0 0.0
    %407 = vmatpush1.msra.mxu0 %v345
    %408 = vmatprep.subr.mxu0 0.0
    %409 = vmatpush1.msra.mxu0 %v346
    %410 = vmatprep.subr.mxu0 0.0
    %411 = vmatpush1.msra.mxu0 %v347
    %412 = vmatprep.mubr.f32.mxu0 %v311
    %413 = vmatmul.mubr.f32.gmra.mrb[0].mxu0 %v310
    %v414 = vpop.f32.mrb[0].mxu0
    %v415 = vadd.f32 0.0, %v414
    %v416 = vpop.f32.mrb[0].mxu0
    %417 = vmatprep.mubr.f32.mxu0 %v313
    %418 = vmatmul.mubr.f32.gmra.mrb[0].mxu0 %v312
    %v419 = vpop.f32.mrb[0].mxu0
    %v420 = vadd.f32 0.0, %v419
    %v421 = vpop.f32.mrb[0].mxu0
    %422 = vdwg.mxu0
    %v423 = vadd.f32 %v314, %v415
    %v424 = vadd.f32 %v315, %v420
    %425 = vst [vmem:[#allocation2] sm:$0xff] %v423
    %426 = vst [vmem:[#allocation2 + $0x8] sm:$0xff] %v424
    // Predicated region
    $region30: #{mlp_forward.1} parent=1 // pred_check
      %p427 = pneg %p56
    $region31: #{mlp_forward.1} parent=1 // pred_check_branch
      %429 = sbr.rel (%p427) target = $region33
    $region32: #{mlp_forward.1} parent=1 // pred_region
      %v430 = vld [vmem:[#allocation2] sm:$0xff]
      %v431 = vld [vmem:[#allocation2 + $0x8] sm:$0xff]
      %432 = vst [vmem:[#allocation9] sm:$0xff] %v430
      %433 = vst [vmem:[#allocation9 + $0x8] sm:$0xff] %v431
    $region33: #{mlp_forward.1} parent=1 // pred_fallthru
      _
    // Predicated region
    $region34: #{mlp_forward.1} parent=1 // pred_check
      _
    $region35: #{mlp_forward.1} parent=1 // pred_check_branch
      %435 = sbr.rel (0) target = $region37
    $region36: #{mlp_forward.1} parent=1 // pred_region
      %s437 = ssub.s32 256, 256
      %438 = vsyncadd [#allocation5], %s437
      %s439 = sshll.u32 [#allocation9], 4
      %s440 = int_to_ptr.vmem [resolvable:$true] %s439
      %445 = dma.vmem_to_hbm [thread:$0]  %s440, 256, %s3, [#allocation5], 128, 128, 8
    $region37: #{mlp_forward.1} parent=1 // pred_fallthru
      _
    // Predicated region
    $region38: #{mlp_forward.1} parent=1 // pred_check
      _
    $region39: #{mlp_forward.1} parent=1 // pred_check_branch
      %447 = sbr.rel (0) target = $region41
    $region40: #{mlp_forward.1} parent=1 // pred_region
      %448 = dma.done [#allocation5], 256
    $region41: #{mlp_forward.1} parent=1 // pred_fallthru
      _
    %449 = vsyncpa [#allocation4], 1
    %450 = vsyncpa [#allocation7], 1
    %451 = vsyncpa [#allocation5], 1

</llo_original>
